<compile_context>
chip_gen: v5e
topology: v5e:2x2
jax: 0.10.0
libtpu: 0.0.40
codegen_flags: <defaults>
</compile_context>

<pallas_src>
import functools

import jax
import jax.numpy as jnp
from jax.experimental import pallas as pl
from jax.experimental.pallas import tpu as pltpu


def _circpad_kernel(x_ref, o_ref, *, h, w, H, W):
    """x_ref: (Pb, H, W) -> o_ref: (Pb, H + 2h, W + 2w)."""
    x = x_ref[...]
    half = W // 2

    def wrap_w(t):
        # circular width pad: left = last w cols, right = first w cols.
        if w == 0:
            return t
        return jnp.concatenate([t[:, :, W - w:], t, t[:, :, :w]], axis=-1)

    # ---- center rows: source-side wrap, one full-width lane-aligned store ----
    center = wrap_w(x)                       # (Pb, H, W + 2w)
    if h == 0:
        o_ref[...] = center
        return
    o_ref[:, h:h + H, :] = center

    # ---- pole rows: flipped slab + fused roll(W/2)+wrap, two slab stores ----
    def pole(row_indices):
        # Gather input rows already in flipped output order -> (Pb, h, W).
        rows = [x[:, r:r + 1, :] for r in row_indices]
        slab = rows[0] if len(rows) == 1 else jnp.concatenate(rows, axis=1)
        # Fused roll-by-W/2 (== x[..., arange(-W//2, W//2)]) + width wrap as a
        # single lane concat (no intermediate rolled copy).
        if w == 0:
            return jnp.concatenate([slab[:, :, half:], slab[:, :, :half]],
                                   axis=-1)
        if w <= half:
            return jnp.concatenate(
                [slab[:, :, half - w:half],    # left wrap  (last w of rolled)
                 slab[:, :, half:],            # rolled row, first half
                 slab[:, :, :half],            # rolled row, second half
                 slab[:, :, half:half + w]],   # right wrap (first w of rolled)
                axis=-1)
        # Rare wide-wrap case (w > W/2): two-step concat.
        rolled = jnp.concatenate([slab[:, :, half:], slab[:, :, :half]],
                                 axis=-1)
        return jnp.concatenate(
            [rolled[:, :, W - w:], rolled, rolled[:, :, :w]], axis=-1)

    # output row i       <- input row h-1-i   (top pole)
    # output row h+H+i   <- input row H-1-i   (bottom pole)
    top = pole(list(range(h - 1, -1, -1)))
    bot = pole(list(range(H - 1, H - h - 1, -1)))
    o_ref[:, :h, :] = top
    o_ref[:, h + H:, :] = bot


def _circ_pad_ref(x, padding):
    """Pure-JAX reference matching the PyTorch forward exactly."""
    if isinstance(padding, int):
        h = w = int(padding)
    else:
        h, w = int(padding[0]), int(padding[1])
    _, _, H, W = x.shape
    if h == 0 and w == 0:
        return x
    if h == 0:
        core = x
    else:
        rolled = jnp.roll(x, W // 2, axis=3)  # == x[:, :, :, arange(-W//2, W//2)]
        up = jnp.flip(rolled[:, :, :h, :], axis=2)
        down = jnp.flip(rolled[:, :, H - h:, :], axis=2)
        core = jnp.concatenate([up, x, down], axis=2)
    if w == 0:
        return core
    return jnp.concatenate([core[..., W - w:], core, core[..., :w]], axis=3)


def circ_pad(x, padding):
    """Pallas implementation of CircPad.forward (NCHW)."""
    if isinstance(padding, int):
        h = w = int(padding)
    else:
        h, w = int(padding[0]), int(padding[1])

    N, C, H, W = x.shape
    assert H % 2 == 0 and W % 2 == 0          # matches the module's assert
    assert 0 <= h <= H and 0 <= w <= W, "padding must not exceed spatial dims"

    if h == 0 and w == 0:
        return x

    Ho, Wo = H + 2 * h, W + 2 * w
    itemsize = jnp.dtype(x.dtype).itemsize
    P = N * C

    # Accounted live VMEM bytes per plane in a block:
    #   2x double-buffered input + 2x double-buffered output
    #   + ~1 input-sized loaded value + ~1 output-sized concat intermediate.
    per_plane = 3 * (H * W + Ho * Wo) * itemsize
    budget_bytes = 20 * 1024 * 1024           # safe on v5e/v6e (128 MiB) and v7x (64 MiB)

    if per_plane > budget_bytes:
        # TODO(synk): H-tile huge planes inside the kernel instead of this XLA fallback.
        return _circ_pad_ref(x, (h, w))

    max_pb = max(1, budget_bytes // per_plane)
    divisors = [d for d in range(1, P + 1) if P % d == 0 and d <= max_pb]
    # Prefer >=2 grid steps along the parallel axis so both v7x TCs get work.
    multi = [d for d in divisors if P // d >= 2]
    Pb = (multi or divisors)[-1]

    kernel = functools.partial(_circpad_kernel, h=h, w=w, H=H, W=W)
    bytes_accessed = P * (H * W + Ho * Wo) * itemsize

    out = pl.pallas_call(
        kernel,
        out_shape=jax.ShapeDtypeStruct((P, Ho, Wo), x.dtype),
        grid_spec=pltpu.PrefetchScalarGridSpec(
            num_scalar_prefetch=0,
            grid=(P // Pb,),
            in_specs=[pl.BlockSpec((Pb, H, W), lambda p: (p, 0, 0))],
            out_specs=pl.BlockSpec((Pb, Ho, Wo), lambda p: (p, 0, 0)),
        ),
        compiler_params=pltpu.CompilerParams(
            dimension_semantics=("parallel",),
            vmem_limit_bytes=48 * 1024 * 1024,
        ),
        cost_estimate=pl.CostEstimate(
            flops=0, transcendentals=0, bytes_accessed=bytes_accessed),
    )(x.reshape(P, H, W))

    return out.reshape(N, C, Ho, Wo)


if __name__ == "__main__":
    key = jax.random.PRNGKey(0)
    N, C, H, W = 2, 4, 16, 16
    x = jax.random.normal(key, (N, C, H, W), dtype=jnp.float32)

    # Cover the module's branches: (h>0, w>0), larger h, h==0, w==0, int padding.
    for padding in [(1, 2), (2, 3), (0, 2), (2, 0), 2]:
        out = jax.block_until_ready(circ_pad(x, padding))
        ref = _circ_pad_ref(x, padding)
        assert out.shape == ref.shape, (padding, out.shape, ref.shape)
        assert jnp.array_equal(out, ref), f"mismatch vs reference for padding={padding}"

    print("KERNEL_OK")
</pallas_src>

<mosaic_0001>
module attributes {stable_mosaic.version = 11 : i64} {
  func.func @_circpad_kernel(%arg0: i32, %arg1: memref<4x16x16xf32, #tpu.memory_space<vmem>>, %arg2: memref<4x18x20xf32, #tpu.memory_space<vmem>>) attributes {dimension_semantics = [#tpu.dimension_semantics<parallel>], iteration_bounds = array<i64: 2>, scalar_prefetch = 0 : i64, scratch_operands = 0 : i64, tpu.core_type = #tpu.core_type<tc>, window_params = [{transform_indices = @transform_0, window_bounds = array<i64: 4, 16, 16>}, {transform_indices = @transform_1, window_bounds = array<i64: 4, 18, 20>}]} {
    %c0 = arith.constant 0 : index
    %c0_0 = arith.constant 0 : index
    %c0_1 = arith.constant 0 : index
    %0 = vector.load %arg1[%c0, %c0_0, %c0_1] : memref<4x16x16xf32, #tpu.memory_space<vmem>>, vector<4x16x16xf32>
    %1 = vector.extract_strided_slice %0 {offsets = [0, 0, 14], sizes = [4, 16, 2], strides = [1, 1, 1]} : vector<4x16x16xf32> to vector<4x16x2xf32>
    %2 = vector.extract_strided_slice %0 {offsets = [0, 0, 0], sizes = [4, 16, 2], strides = [1, 1, 1]} : vector<4x16x16xf32> to vector<4x16x2xf32>
    %3 = tpu.concatenate %1, %0, %2 in 2 : vector<4x16x2xf32>, vector<4x16x16xf32>, vector<4x16x2xf32> -> vector<4x16x20xf32>
    %c0_2 = arith.constant 0 : index
    %c1 = arith.constant 1 : index
    %c0_3 = arith.constant 0 : index
    %4 = vector.load %arg2[%c0_2, %c1, %c0_3] : memref<4x18x20xf32, #tpu.memory_space<vmem>>, vector<4x16x20xf32>
    tpu.vector_store %arg2[%c0_2, %c1, %c0_3], %3 {strides = array<i32>} : memref<4x18x20xf32, #tpu.memory_space<vmem>>, vector<4x16x20xf32>,
    %5 = vector.extract_strided_slice %0 {offsets = [0, 0, 0], sizes = [4, 1, 16], strides = [1, 1, 1]} : vector<4x16x16xf32> to vector<4x1x16xf32>
    %6 = vector.extract_strided_slice %5 {offsets = [0, 0, 6], sizes = [4, 1, 2], strides = [1, 1, 1]} : vector<4x1x16xf32> to vector<4x1x2xf32>
    %7 = vector.extract_strided_slice %5 {offsets = [0, 0, 8], sizes = [4, 1, 8], strides = [1, 1, 1]} : vector<4x1x16xf32> to vector<4x1x8xf32>
    %8 = vector.extract_strided_slice %5 {offsets = [0, 0, 0], sizes = [4, 1, 8], strides = [1, 1, 1]} : vector<4x1x16xf32> to vector<4x1x8xf32>
    %9 = vector.extract_strided_slice %5 {offsets = [0, 0, 8], sizes = [4, 1, 2], strides = [1, 1, 1]} : vector<4x1x16xf32> to vector<4x1x2xf32>
    %10 = tpu.concatenate %6, %7, %8, %9 in 2 : vector<4x1x2xf32>, vector<4x1x8xf32>, vector<4x1x8xf32>, vector<4x1x2xf32> -> vector<4x1x20xf32>
    %11 = vector.extract_strided_slice %0 {offsets = [0, 15, 0], sizes = [4, 1, 16], strides = [1, 1, 1]} : vector<4x16x16xf32> to vector<4x1x16xf32>
    %12 = vector.extract_strided_slice %11 {offsets = [0, 0, 6], sizes = [4, 1, 2], strides = [1, 1, 1]} : vector<4x1x16xf32> to vector<4x1x2xf32>
    %13 = vector.extract_strided_slice %11 {offsets = [0, 0, 8], sizes = [4, 1, 8], strides = [1, 1, 1]} : vector<4x1x16xf32> to vector<4x1x8xf32>
    %14 = vector.extract_strided_slice %11 {offsets = [0, 0, 0], sizes = [4, 1, 8], strides = [1, 1, 1]} : vector<4x1x16xf32> to vector<4x1x8xf32>
    %15 = vector.extract_strided_slice %11 {offsets = [0, 0, 8], sizes = [4, 1, 2], strides = [1, 1, 1]} : vector<4x1x16xf32> to vector<4x1x2xf32>
    %16 = tpu.concatenate %12, %13, %14, %15 in 2 : vector<4x1x2xf32>, vector<4x1x8xf32>, vector<4x1x8xf32>, vector<4x1x2xf32> -> vector<4x1x20xf32>
    %c0_4 = arith.constant 0 : index
    %c0_5 = arith.constant 0 : index
    %c0_6 = arith.constant 0 : index
    %17 = vector.load %arg2[%c0_4, %c0_5, %c0_6] : memref<4x18x20xf32, #tpu.memory_space<vmem>>, vector<4x1x20xf32>
    tpu.vector_store %arg2[%c0_4, %c0_5, %c0_6], %10 {strides = array<i32>} : memref<4x18x20xf32, #tpu.memory_space<vmem>>, vector<4x1x20xf32>,
    %c0_7 = arith.constant 0 : index
    %c17 = arith.constant 17 : index
    %c0_8 = arith.constant 0 : index
    %18 = vector.load %arg2[%c0_7, %c17, %c0_8] : memref<4x18x20xf32, #tpu.memory_space<vmem>>, vector<4x1x20xf32>
    tpu.vector_store %arg2[%c0_7, %c17, %c0_8], %16 {strides = array<i32>} : memref<4x18x20xf32, #tpu.memory_space<vmem>>, vector<4x1x20xf32>,
    return
  }
  func.func @transform_0(%arg0: i32) -> (i32, i32, i32) {
    %c0_i32 = arith.constant 0 : i32
    %c0_i32_0 = arith.constant 0 : i32
    %c0_i32_1 = arith.constant 0 : i32
    return %arg0, %c0_i32, %c0_i32_0 : i32, i32, i32
  }
  func.func @transform_1(%arg0: i32) -> (i32, i32, i32) {
    %c0_i32 = arith.constant 0 : i32
    %c0_i32_0 = arith.constant 0 : i32
    %c0_i32_1 = arith.constant 0 : i32
    return %arg0, %c0_i32, %c0_i32_0 : i32, i32, i32
  }
}

</mosaic_0001>

<llo_original>
// kernel: tpu_custom_call.1
$region0: #{tpu_custom_call.1}
  #allocation0 [shape = 'u32[]', space=smem, size = 0x4, offset = 0x4, fixed_abs, tag = 'smem constant byte address 0x4 - core index']
  #allocation1 [shape = 'u32[72,128]{1,0:T(1,128)}', space=vmem, size = 0x9000, scoped, tag = 'internal scratch']
  %s0 = inlined_call_operand.hbm [shape: f32[8,16,16], index: 0, kind: input, shape index: {}]
  %s1 = inlined_call_operand.vmem [shape: f32[8,18,20], index: 1, kind: output, shape index: {}]
  %s2 = sld [smem:[#allocation0]]
  $region41: #{tpu_custom_call.1} parent=0
    _
  %s4 = ssub.s32 1, %s2
  %s5 = scalar_select 0, %s4, %s2
  $region1: #{tpu_custom_call.1} parent=0
    #allocation2 [shape = 'u8[65536]{0}', space=vmem, size = 0x10000, scoped, tag = 'input window, operand 0']
    #allocation3 [shape = 's32[2]{0}', space=sflag, size = 0x8, scoped, tag = 'scoped memory for tpu_custom_call.1']
    %6 = vsyncpa [#allocation3], 0
    %s7 = scalar_lea.sflag [#allocation3], 1
    %8 = vsyncpa %s7, 0
    loop: start=0, step=1, limit=4
    $region2: #{tpu_custom_call.1} parent=1 // loop_pre_header
      _
    $region3: #{tpu_custom_call.1} parent=1 // loop_header
      %s10 = sphi 0, %s14
      %p11 = scmp.ge.s32.totalorder %s10, 4
      %s20 = sphi 0, %s22
      %s23 = sphi 0, %s20
      %s24 = sphi 0, %s23
      %s40 = sphi 0, %s24
      %s46 = sphi 0, %s48
      %s49 = sphi 0, %s46
      %s50 = sphi 0, %s49
      %s66 = sphi 0, %s50
    $region4: #{tpu_custom_call.1} parent=1 // loop_header_branch
      %13 = sbr.rel (%p11) target = $region8
    $region5: #{tpu_custom_call.1} parent=1 // loop_body
      %s15 = ssub.s32 %s10, 1
      %s16 = ssub.s32 %s10, 2
      %s17 = sadd.s32 %s10, 1
      %s18 = ssub.s32 %s10, %s17
      %p19 = scmp.eq.s32.totalorder %s18, 0
      %s21 = sadd.s32 %s20, 1
      %s22 = scalar_select %p19, %s20, %s21
      %p25 = pneg %p19
      %p26 = scmp.eq.s32.totalorder %s10, 1
      %p27 = por %p25, %p26
      %p28 = scmp.ne.s32.totalorder %s20, %s23
      %p29 = scmp.eq.s32.totalorder %s10, 0
      %p30 = por %p28, %p29
      %p31 = scmp.ne.s32.totalorder %s20, %s23
      %p32 = scmp.eq.s32.totalorder %s15, 1
      %p33 = por %p31, %p32
      %p34 = scmp.ne.s32.totalorder %s23, %s24
      %p35 = scmp.eq.s32.totalorder %s15, 0
      %p36 = por %p34, %p35
      %p37 = scmp.ne.s32.totalorder %s23, %s24
      %p38 = scmp.eq.s32.totalorder %s16, 1
      %p39 = por %p37, %p38
      %p41 = scmp.ne.s32.totalorder %s24, %s40
      %p42 = scmp.eq.s32.totalorder %s16, 0
      %p43 = por %p41, %p42
      %s44 = ssub.s32 %s10, %s17
      %p45 = scmp.eq.s32.totalorder %s44, 0
      %s47 = sadd.s32 %s46, 1
      %s48 = scalar_select %p45, %s46, %s47
      %p51 = pneg %p45
      %p52 = scmp.eq.s32.totalorder %s10, 1
      %p53 = por %p51, %p52
      %p54 = scmp.ne.s32.totalorder %s46, %s49
      %p55 = scmp.eq.s32.totalorder %s10, 0
      %p56 = por %p54, %p55
      %p57 = scmp.ne.s32.totalorder %s46, %s49
      %p58 = scmp.eq.s32.totalorder %s15, 1
      %p59 = por %p57, %p58
      %p60 = scmp.ne.s32.totalorder %s49, %s50
      %p61 = scmp.eq.s32.totalorder %s15, 0
      %p62 = por %p60, %p61
      %p63 = scmp.ne.s32.totalorder %s49, %s50
      %p64 = scmp.eq.s32.totalorder %s16, 1
      %p65 = por %p63, %p64
      %p67 = scmp.ne.s32.totalorder %s50, %s66
      %p68 = scmp.eq.s32.totalorder %s16, 0
      %p69 = por %p67, %p68
      %p70 = scmp.le.s32.totalorder 1, %s10
      %p71 = scmp.lt.s32.totalorder %s10, 3
      %p72 = pnand %p70, %p71
      %p73 = pneg %p72
      // Predicated region
      $region9: #{tpu_custom_call.1} parent=5 // pred_check
        _
      $region10: #{tpu_custom_call.1} parent=5 // pred_check_branch
        %75 = sbr.rel (%p72) target = $region12
      $region11: #{tpu_custom_call.1} parent=5 // pred_region
        %s76 = ssub.s32 %s10, 1
      $region12: #{tpu_custom_call.1} parent=5 // pred_fallthru
        _
      %p77 = scmp.lt.s32.totalorder %s10, 2
      // Predicated region
      $region13: #{tpu_custom_call.1} parent=5 // pred_check
        %p78 = pneg %p77
      $region14: #{tpu_custom_call.1} parent=5 // pred_check_branch
        %80 = sbr.rel (%p78) target = $region16
      $region15: #{tpu_custom_call.1} parent=5 // pred_region
        // Predicated region
        $region17: #{tpu_custom_call.1} parent=15 // pred_check
          %p81 = pneg %p30
        $region18: #{tpu_custom_call.1} parent=15 // pred_check_branch
          %83 = sbr.rel (%p81) target = $region20
        $region19: #{tpu_custom_call.1} parent=15 // pred_region
          %s84 = sand.u32 %s20, 1
          %s85 = scalar_lea.sflag [#allocation3], %s84
          %s86 = sand.u32 %s20, 1
          %s87 = smul.addr %s86, 64
          %s88 = scalar_lea.vmem [#allocation2], %s87
          %s89 = smul.u32 4, %s10
          %91 = vsyncadd %s85, 0
          %s92 = smul.addr %s89, 2
          %s93 = smul.addr %s92, 8
          %s94 = scalar_lea.hbm %s0, %s93
          %s95 = sshll.u32 %s94, 4
          %s96 = int_to_ptr.hbm [resolvable:$true] %s95
          %s97 = sshll.u32 %s88, 4
          %s98 = int_to_ptr.vmem [resolvable:$true] %s97
          %103 = dma.hbm_to_vmem [thread:$0]  %s96, 1024, %s98, %s85, 128, 128, 8
        $region20: #{tpu_custom_call.1} parent=15 // pred_fallthru
          _
      $region16: #{tpu_custom_call.1} parent=5 // pred_fallthru
        _
      %p104 = scmp.le.s32.totalorder 1, %s10
      %p105 = scmp.lt.s32.totalorder %s10, 3
      %p106 = pnand %p104, %p105
      %p107 = pneg %p106
      // Predicated region
      $region21: #{tpu_custom_call.1} parent=5 // pred_check
        _
      $region22: #{tpu_custom_call.1} parent=5 // pred_check_branch
        %109 = sbr.rel (%p106) target = $region24
      $region23: #{tpu_custom_call.1} parent=5 // pred_region
        %s110 = ssub.s32 %s10, 1
        %s111 = sand.u32 %s23, 1
        %s112 = scalar_lea.sflag [#allocation3], %s111
        %s113 = sand.u32 %s23, 1
        %s114 = smul.addr %s113, 64
        %s115 = scalar_lea.vmem [#allocation2], %s114
        // Predicated region
        $region25: #{tpu_custom_call.1} parent=23 // pred_check
          %p116 = pneg %p36
        $region26: #{tpu_custom_call.1} parent=23 // pred_check_branch
          %118 = sbr.rel (%p116) target = $region28
        $region27: #{tpu_custom_call.1} parent=23 // pred_region
          %120 = dma.done %s112, 1024
        $region28: #{tpu_custom_call.1} parent=23 // pred_fallthru
          _
        %s121 = sand.u32 %s23, 1
        %s122 = scalar_lea.sflag [#allocation3], %s121
        %s123 = sand.u32 %s23, 1
        %s124 = smul.addr %s123, 64
        %s125 = scalar_lea.vmem [#allocation2], %s124
        %p126 = pneg %p36
        %p127 = pneg %p33
        %p128 = pneg %p62
        %p129 = pneg %p59
        %s130 = smul.u32 4, %s15
        %p131 = scmp.lt.s32.totalorder %s130, 7
        %s132 = scalar_select %p131, %s130, 7
        %s133 = smul.addr %s132, 3
        %s134 = smul.addr %s133, 8
        %s135 = scalar_lea.vmem %s1, %s134
        %s136 = smul.u32 4, %s15
        %s137 = smul.u32 4, %s15
        %p138 = scmp.lt.s32.totalorder %s137, 7
        %s139 = scalar_select %p138, %s137, 7
        %s140 = smul.addr %s139, 3
        %s141 = smul.addr %s140, 8
        %s142 = scalar_lea.vmem %s1, %s141
        %s143 = smul.u32 4, %s15
        %v144 = vld [vmem:[%s115] sm:$0xff]
        %v145 = vld [vmem:[%s115 + $0x8] sm:$0xff]
        %v146 = vld [vmem:[%s115 + $0x10] sm:$0xff]
        %v147 = vld [vmem:[%s115 + $0x18] sm:$0xff]
        %v148 = vld [vmem:[%s115 + $0x20] sm:$0xff]
        %v149 = vld [vmem:[%s115 + $0x28] sm:$0xff]
        %v150 = vld [vmem:[%s115 + $0x30] sm:$0xff]
        %v151 = vld [vmem:[%s115 + $0x38] sm:$0xff]
        %160 = vrot.lane.b32.xlu0 %v144, 114
        %v161 = vpop.permute.xlu0 %160
        %162 = vrot.lane.b32.xlu0 %v145, 114
        %v163 = vpop.permute.xlu0 %162
        %164 = vrot.lane.b32.xlu0 %v146, 114
        %v165 = vpop.permute.xlu0 %164
        %166 = vrot.lane.b32.xlu0 %v147, 114
        %v167 = vpop.permute.xlu0 %166
        %168 = vrot.lane.b32.xlu0 %v148, 114
        %v169 = vpop.permute.xlu0 %168
        %170 = vrot.lane.b32.xlu0 %v149, 114
        %v171 = vpop.permute.xlu0 %170
        %172 = vrot.lane.b32.xlu0 %v150, 114
        %v173 = vpop.permute.xlu0 %172
        %174 = vrot.lane.b32.xlu0 %v151, 114
        %v175 = vpop.permute.xlu0 %174
        %184 = vrot.lane.b32.xlu0 %v144, 2
        %v185 = vpop.permute.xlu0 %184
        %186 = vrot.lane.b32.xlu0 %v145, 2
        %v187 = vpop.permute.xlu0 %186
        %188 = vrot.lane.b32.xlu0 %v146, 2
        %v189 = vpop.permute.xlu0 %188
        %190 = vrot.lane.b32.xlu0 %v147, 2
        %v191 = vpop.permute.xlu0 %190
        %192 = vrot.lane.b32.xlu0 %v148, 2
        %v193 = vpop.permute.xlu0 %192
        %194 = vrot.lane.b32.xlu0 %v149, 2
        %v195 = vpop.permute.xlu0 %194
        %196 = vrot.lane.b32.xlu0 %v150, 2
        %v197 = vpop.permute.xlu0 %196
        %198 = vrot.lane.b32.xlu0 %v151, 2
        %v199 = vpop.permute.xlu0 %198
        %208 = vrot.lane.b32.xlu0 %v144, 18
        %v209 = vpop.permute.xlu0 %208
        %210 = vrot.lane.b32.xlu0 %v145, 18
        %v211 = vpop.permute.xlu0 %210
        %212 = vrot.lane.b32.xlu0 %v146, 18
        %v213 = vpop.permute.xlu0 %212
        %214 = vrot.lane.b32.xlu0 %v147, 18
        %v215 = vpop.permute.xlu0 %214
        %216 = vrot.lane.b32.xlu0 %v148, 18
        %v217 = vpop.permute.xlu0 %216
        %218 = vrot.lane.b32.xlu0 %v149, 18
        %v219 = vpop.permute.xlu0 %218
        %220 = vrot.lane.b32.xlu0 %v150, 18
        %v221 = vpop.permute.xlu0 %220
        %222 = vrot.lane.b32.xlu0 %v151, 18
        %v223 = vpop.permute.xlu0 %222
        %vm232 = vcmask 15360
        %v233 = vsel %vm232, %v161, %v185
        %v234 = vsel %vm232, %v163, %v187
        %v235 = vsel %vm232, %v165, %v189
        %v236 = vsel %vm232, %v167, %v191
        %v237 = vsel %vm232, %v169, %v193
        %v238 = vsel %vm232, %v171, %v195
        %v239 = vsel %vm232, %v173, %v197
        %v240 = vsel %vm232, %v175, %v199
        %vm241 = vcmask 146432
        %v242 = vsel %vm241, %v233, %v209
        %v243 = vsel %vm241, %v234, %v211
        %v244 = vsel %vm241, %v235, %v213
        %v245 = vsel %vm241, %v236, %v215
        %v246 = vsel %vm241, %v237, %v217
        %v247 = vsel %vm241, %v238, %v219
        %v248 = vsel %vm241, %v239, %v221
        %v249 = vsel %vm241, %v240, %v223
        %vm250 = vcmask 162816
        %251 = vst.msk [vmem:[%s142 + $0x1] sm:$0xff] %vm250, %v242
        %252 = vst.msk [vmem:[%s142 + $0x9] sm:$0xff] %vm250, %v243
        %253 = vst.msk [vmem:[%s142 + $0x19] sm:$0xff] %vm250, %v244
        %254 = vst.msk [vmem:[%s142 + $0x21] sm:$0xff] %vm250, %v245
        %255 = vst.msk [vmem:[%s142 + $0x31] sm:$0xff] %vm250, %v246
        %256 = vst.msk [vmem:[%s142 + $0x39] sm:$0xff] %vm250, %v247
        %257 = vst.msk [vmem:[%s142 + $0x49] sm:$0xff] %vm250, %v248
        %258 = vst.msk [vmem:[%s142 + $0x51] sm:$0xff] %vm250, %v249
        %259 = vrot.lane.b32.xlu0 %v144, 122
        %v260 = vpop.permute.xlu0 %259
        %261 = vrot.lane.b32.xlu0 %v146, 122
        %v262 = vpop.permute.xlu0 %261
        %263 = vrot.lane.b32.xlu0 %v148, 122
        %v264 = vpop.permute.xlu0 %263
        %265 = vrot.lane.b32.xlu0 %v150, 122
        %v266 = vpop.permute.xlu0 %265
        %271 = vrot.lane.b32.xlu0 %v144, 10
        %v272 = vpop.permute.xlu0 %271
        %273 = vrot.lane.b32.xlu0 %v146, 10
        %v274 = vpop.permute.xlu0 %273
        %275 = vrot.lane.b32.xlu0 %v148, 10
        %v276 = vpop.permute.xlu0 %275
        %277 = vrot.lane.b32.xlu0 %v150, 10
        %v278 = vpop.permute.xlu0 %277
        %vm283 = vcmask 80896
        %v284 = vsel %vm283, %v260, %v272
        %v285 = vsel %vm283, %v262, %v274
        %v286 = vsel %vm283, %v264, %v276
        %v287 = vsel %vm283, %v266, %v278
        %v288 = vsel %vm241, %v284, %v272
        %v289 = vsel %vm241, %v285, %v274
        %v290 = vsel %vm241, %v286, %v276
        %v291 = vsel %vm241, %v287, %v278
        %292 = vrot.lane.b32.xlu0 %v145, 122
        %v293 = vpop.permute.xlu0 %292
        %294 = vrot.lane.b32.xlu0 %v147, 122
        %v295 = vpop.permute.xlu0 %294
        %296 = vrot.lane.b32.xlu0 %v149, 122
        %v297 = vpop.permute.xlu0 %296
        %298 = vrot.lane.b32.xlu0 %v151, 122
        %v299 = vpop.permute.xlu0 %298
        %304 = vrot.lane.b32.xlu0 %v145, 10
        %v305 = vpop.permute.xlu0 %304
        %306 = vrot.lane.b32.xlu0 %v147, 10
        %v307 = vpop.permute.xlu0 %306
        %308 = vrot.lane.b32.xlu0 %v149, 10
        %v309 = vpop.permute.xlu0 %308
        %310 = vrot.lane.b32.xlu0 %v151, 10
        %v311 = vpop.permute.xlu0 %310
        %v316 = vsel %vm283, %v293, %v305
        %v317 = vsel %vm283, %v295, %v307
        %v318 = vsel %vm283, %v297, %v309
        %v319 = vsel %vm283, %v299, %v311
        %v320 = vsel %vm241, %v316, %v305
        %v321 = vsel %vm241, %v317, %v307
        %v322 = vsel %vm241, %v318, %v309
        %v323 = vsel %vm241, %v319, %v311
        %vm324 = vcmask 155648
        %325 = vst.msk [vmem:[%s142] sm:$0x1] %vm324, %v288
        %326 = vst.msk [vmem:[%s142 + $0x18] sm:$0x1] %vm324, %v289
        %327 = vst.msk [vmem:[%s142 + $0x30] sm:$0x1] %vm324, %v290
        %328 = vst.msk [vmem:[%s142 + $0x48] sm:$0x1] %vm324, %v291
        %vm329 = vcmask 162823
        %330 = vst.msk [vmem:[%s142 + $0xa] sm:$0x80] %vm329, %v320
        %331 = vst.msk [vmem:[%s142 + $0x22] sm:$0x80] %vm329, %v321
        %332 = vst.msk [vmem:[%s142 + $0x3a] sm:$0x80] %vm329, %v322
        %333 = vst.msk [vmem:[%s142 + $0x52] sm:$0x80] %vm329, %v323
        %s334 = smul.u32 4, %s15
        %p335 = scmp.lt.s32.totalorder %s334, 7
        %s336 = scalar_select %p335, %s334, 7
        %s337 = smul.addr %s336, 3
        %s338 = smul.addr %s337, 8
        %s339 = scalar_lea.vmem %s1, %s338
        // Predicated region
        $region29: #{tpu_custom_call.1} parent=23 // pred_check
          %p340 = pneg %p59
        $region30: #{tpu_custom_call.1} parent=23 // pred_check_branch
          %342 = sbr.rel (%p340) target = $region32
        $region31: #{tpu_custom_call.1} parent=23 // pred_region
          %s343 = smul.u32 4, %s15
        $region32: #{tpu_custom_call.1} parent=23 // pred_fallthru
          _
      $region24: #{tpu_custom_call.1} parent=5 // pred_fallthru
        _
      %p344 = scmp.le.s32.totalorder 2, %s10
      // Predicated region
      $region33: #{tpu_custom_call.1} parent=5 // pred_check
        %p345 = pneg %p344
      $region34: #{tpu_custom_call.1} parent=5 // pred_check_branch
        %347 = sbr.rel (%p345) target = $region36
      $region35: #{tpu_custom_call.1} parent=5 // pred_region
        %s348 = ssub.s32 %s10, 2
        // Predicated region
        $region37: #{tpu_custom_call.1} parent=35 // pred_check
          %p349 = pneg %p65
        $region38: #{tpu_custom_call.1} parent=35 // pred_check_branch
          %351 = sbr.rel (%p349) target = $region40
        $region39: #{tpu_custom_call.1} parent=35 // pred_region
          %s352 = smul.u32 4, %s16
          %p353 = scmp.lt.s32.totalorder %s352, 7
          %s354 = scalar_select %p353, %s352, 7
          %s355 = smul.addr %s354, 3
          %s356 = smul.addr %s355, 8
          %s357 = scalar_lea.vmem %s1, %s356
        $region40: #{tpu_custom_call.1} parent=35 // pred_fallthru
          _
      $region36: #{tpu_custom_call.1} parent=5 // pred_fallthru
        _
    $region6: #{tpu_custom_call.1} parent=1 // loop_footer
      %s14 = sadd.s32 1, %s10
    $region7: #{tpu_custom_call.1} parent=1 // loop_footer_branch
      %9 = sbr.rel target = $region3
    $region8: #{tpu_custom_call.1} parent=1 // loop_exit
      _
    %358 = vsyncpa [#allocation3], 1
    %s359 = scalar_lea.sflag [#allocation3], 1
    %360 = vsyncpa %s359, 1

</llo_original>
